<compile_context>
chip_gen: v6e
topology: v6e:2x2x1
jax: 0.10.0
libtpu: 0.0.40
codegen_flags: <defaults>
</compile_context>

<pallas_src>
import math
import functools

import jax
import jax.numpy as jnp
from jax.experimental import pallas as pl
from jax.experimental.pallas import tpu as pltpu


def _round_up(x, m):
    return (x + m - 1) // m * m


# ----------------------------------------------------------------------------
# Fused (LayerNorm -> Linear) Pallas kernel
# ----------------------------------------------------------------------------

def _prenorm_linear_kernel(x_ref, g_ref, bln_ref, w_ref, b_ref, o_ref, *, eps):
    # x_ref:   (tm, K)   activation tile (full feature dim so LN stats are exact)
    # g_ref:   (1, K)    LayerNorm gamma
    # bln_ref: (1, K)    LayerNorm beta
    # w_ref:   (K, tn)   projection weight tile (bf16 for the MXU)
    # b_ref:   (1, tn)   projection bias tile (f32)
    # o_ref:   (tm, tn)  output tile
    x = x_ref[...].astype(jnp.float32)
    mu = jnp.mean(x, axis=-1, keepdims=True)
    var = jnp.mean(jnp.square(x - mu), axis=-1, keepdims=True)
    xn = (x - mu) * jax.lax.rsqrt(var + eps)
    xn = xn * g_ref[...].astype(jnp.float32) + bln_ref[...].astype(jnp.float32)

    y = jnp.dot(xn.astype(w_ref.dtype), w_ref[...],
                preferred_element_type=jnp.float32)
    y = y + b_ref[...].astype(jnp.float32)
    o_ref[...] = y.astype(o_ref.dtype)


def prenorm_linear_up_projection(x, gamma, beta, w, b, *, eps=1e-5,
                                 matmul_dtype=jnp.bfloat16):
    """x: (..., K), gamma/beta: (K,), w: (K, N), b: (N,) -> (..., N)."""
    lead = x.shape[:-1]
    K = x.shape[-1]
    N = w.shape[1]

    x2 = x.reshape(-1, K)
    M = x2.shape[0]

    # --- row (M) tiling: pad rows up to a tile multiple; zero rows stay finite under LN.
    tm = min(512, _round_up(M, 8))
    m_pad = _round_up(M, tm)
    if m_pad != M:
        x2 = jnp.pad(x2, ((0, m_pad - M), (0, 0)))

    # --- output-column (N) tiling: prefer lane-dense (multiple of 128) tiles.
    if N % 512 == 0:
        tn = 512
    elif N % 256 == 0:
        tn = 256
    elif N % 128 == 0:
        tn = 128
    else:
        tn = N  # full-dim block still satisfies the tiling rules

    grid = (m_pad // tm, N // tn)

    w_mxu = w.astype(matmul_dtype)          # one-time cast; halves weight HBM/VMEM bytes
    g2 = gamma.reshape(1, K).astype(jnp.float32)
    bt2 = beta.reshape(1, K).astype(jnp.float32)
    b2 = b.reshape(1, N).astype(jnp.float32)

    out = pl.pallas_call(
        functools.partial(_prenorm_linear_kernel, eps=eps),
        out_shape=jax.ShapeDtypeStruct((m_pad, N), x.dtype),
        grid=grid,
        in_specs=[
            pl.BlockSpec((tm, K), lambda i, j: (i, 0)),   # activations: row tile, full K
            pl.BlockSpec((1, K), lambda i, j: (0, 0)),    # gamma
            pl.BlockSpec((1, K), lambda i, j: (0, 0)),    # beta
            pl.BlockSpec((K, tn), lambda i, j: (0, j)),   # weight: full K, column tile
            pl.BlockSpec((1, tn), lambda i, j: (0, j)),   # bias
        ],
        out_specs=pl.BlockSpec((tm, tn), lambda i, j: (i, j)),
        compiler_params=pltpu.CompilerParams(
            dimension_semantics=("parallel", "parallel"),
        ),
    )(x2, g2, bt2, w_mxu, b2)

    if m_pad != M:
        out = out[:M]
    return out.reshape(*lead, N)


# ----------------------------------------------------------------------------
# Pure-JAX reference (torch semantics: biased variance, eps inside sqrt)
# ----------------------------------------------------------------------------

def _reference(x, gamma, beta, w, b, eps=1e-5):
    mu = jnp.mean(x, axis=-1, keepdims=True)
    var = jnp.mean(jnp.square(x - mu), axis=-1, keepdims=True)
    xn = (x - mu) / jnp.sqrt(var + eps) * gamma + beta
    return xn @ w + b


# ----------------------------------------------------------------------------
# Main
# ----------------------------------------------------------------------------

if __name__ == "__main__":
    key = jax.random.PRNGKey(0)

    # Small but lane-dense shapes consistent with the module.
    batch, seq = 2, 64
    dim, upproj_factor = 256, 2
    N = dim * upproj_factor

    k1, k2, k3, k4, k5 = jax.random.split(key, 5)
    x = jax.random.normal(k1, (batch, seq, dim), jnp.float32)

    # nn.LayerNorm default init is gamma=1, beta=0; perturb slightly so the affine path is exercised.
    gamma = jnp.ones((dim,), jnp.float32) + 0.1 * jax.random.normal(k2, (dim,), jnp.float32)
    beta = 0.1 * jax.random.normal(k3, (dim,), jnp.float32)

    # nn.Linear default init: U(-1/sqrt(fan_in), 1/sqrt(fan_in)).
    bound = 1.0 / math.sqrt(dim)
    w = jax.random.uniform(k4, (dim, N), jnp.float32, -bound, bound)
    b = jax.random.uniform(k5, (N,), jnp.float32, -bound, bound)

    out = prenorm_linear_up_projection(x, gamma, beta, w, b)
    out = jax.block_until_ready(out)

    assert out.shape == (batch, seq, N), (out.shape, (batch, seq, N))
    assert bool(jnp.all(jnp.isfinite(out)))

    # Tolerance accounts for the bf16 MXU operands (f32 accumulation); LN itself is full f32.
    ref = _reference(x, gamma, beta, w, b)
    assert bool(jnp.allclose(out, ref, atol=5e-2, rtol=5e-2)), (
        float(jnp.max(jnp.abs(out - ref))))

    print("KERNEL_OK")
</pallas_src>

<mosaic_0001>
module attributes {stable_mosaic.version = 11 : i64} {
  func.func @_prenorm_linear_kernel(%arg0: i32, %arg1: i32, %arg2: memref<128x256xf32, #tpu.memory_space<vmem>>, %arg3: memref<1x256xf32, #tpu.memory_space<vmem>>, %arg4: memref<1x256xf32, #tpu.memory_space<vmem>>, %arg5: memref<256x512xbf16, #tpu.memory_space<vmem>>, %arg6: memref<1x512xf32, #tpu.memory_space<vmem>>, %arg7: memref<128x512xf32, #tpu.memory_space<vmem>>) attributes {dimension_semantics = [#tpu.dimension_semantics<parallel>, #tpu.dimension_semantics<parallel>], iteration_bounds = array<i64: 1, 1>, scalar_prefetch = 0 : i64, scratch_operands = 0 : i64, tpu.core_type = #tpu.core_type<tc>, window_params = [{transform_indices = @transform_0, window_bounds = array<i64: 128, 256>}, {pipeline_mode = #tpu.pipeline_mode<synchronous>, transform_indices = @transform_1, window_bounds = array<i64: 1, 256>}, {pipeline_mode = #tpu.pipeline_mode<synchronous>, transform_indices = @transform_2, window_bounds = array<i64: 1, 256>}, {transform_indices = @transform_3, window_bounds = array<i64: 256, 512>}, {transform_indices = @transform_4, window_bounds = array<i64: 1, 512>}, {transform_indices = @transform_5, window_bounds = array<i64: 128, 512>}]} {
    %c0 = arith.constant 0 : index
    %c0_0 = arith.constant 0 : index
    %0 = vector.load %arg2[%c0, %c0_0] : memref<128x256xf32, #tpu.memory_space<vmem>>, vector<128x256xf32>
    %cst = arith.constant dense<0.000000e+00> : vector<128xf32>
    %1 = vector.multi_reduction <add>, %0, %cst [1] : vector<128x256xf32> to vector<128xf32>
    %2 = vector.shape_cast %1 : vector<128xf32> to vector<128x1xf32>
    %cst_1 = arith.constant 2.560000e+02 : f32
    %3 = vector.broadcast %cst_1 : f32 to vector<128x1xf32>
    %4 = arith.divf %2, %3 : vector<128x1xf32>
    %5 = vector.broadcast %4 : vector<128x1xf32> to vector<128x256xf32>
    %6 = arith.subf %0, %5 : vector<128x256xf32>
    %7 = arith.mulf %6, %6 : vector<128x256xf32>
    %cst_2 = arith.constant dense<0.000000e+00> : vector<128xf32>
    %8 = vector.multi_reduction <add>, %7, %cst_2 [1] : vector<128x256xf32> to vector<128xf32>
    %9 = vector.shape_cast %8 : vector<128xf32> to vector<128x1xf32>
    %cst_3 = arith.constant 2.560000e+02 : f32
    %10 = vector.broadcast %cst_3 : f32 to vector<128x1xf32>
    %11 = arith.divf %9, %10 : vector<128x1xf32>
    %12 = vector.broadcast %4 : vector<128x1xf32> to vector<128x256xf32>
    %13 = arith.subf %0, %12 : vector<128x256xf32>
    %cst_4 = arith.constant 9.99999974E-6 : f32
    %14 = vector.broadcast %cst_4 : f32 to vector<128x1xf32>
    %15 = arith.addf %11, %14 : vector<128x1xf32>
    %16 = math.rsqrt %15 : vector<128x1xf32>
    %17 = vector.broadcast %16 : vector<128x1xf32> to vector<128x256xf32>
    %18 = arith.mulf %13, %17 : vector<128x256xf32>
    %c0_5 = arith.constant 0 : index
    %c0_6 = arith.constant 0 : index
    %19 = vector.load %arg3[%c0_5, %c0_6] : memref<1x256xf32, #tpu.memory_space<vmem>>, vector<1x256xf32>
    %20 = vector.broadcast %19 : vector<1x256xf32> to vector<128x256xf32>
    %21 = arith.mulf %18, %20 : vector<128x256xf32>
    %c0_7 = arith.constant 0 : index
    %c0_8 = arith.constant 0 : index
    %22 = vector.load %arg4[%c0_7, %c0_8] : memref<1x256xf32, #tpu.memory_space<vmem>>, vector<1x256xf32>
    %23 = vector.broadcast %22 : vector<1x256xf32> to vector<128x256xf32>
    %24 = arith.addf %21, %23 : vector<128x256xf32>
    %25 = arith.truncf %24 : vector<128x256xf32> to vector<128x256xbf16>
    %c0_9 = arith.constant 0 : index
    %c0_10 = arith.constant 0 : index
    %26 = vector.load %arg5[%c0_9, %c0_10] : memref<256x512xbf16, #tpu.memory_space<vmem>>, vector<256x512xbf16>
    %cst_11 = arith.constant dense<0.000000e+00> : vector<128x512xf32>
    %27 = tpu.matmul %25, %26, %cst_11 {dimension_numbers = #tpu.dot_dimension_numbers<[1], [0], [0], [1], [0, 0, 1, 1], [], []>} : vector<128x256xbf16>, vector<256x512xbf16>, vector<128x512xf32> -> vector<128x512xf32>
    %c0_12 = arith.constant 0 : index
    %c0_13 = arith.constant 0 : index
    %28 = vector.load %arg6[%c0_12, %c0_13] : memref<1x512xf32, #tpu.memory_space<vmem>>, vector<1x512xf32>
    %29 = vector.broadcast %28 : vector<1x512xf32> to vector<128x512xf32>
    %30 = arith.addf %27, %29 : vector<128x512xf32>
    %c0_14 = arith.constant 0 : index
    %c0_15 = arith.constant 0 : index
    %31 = vector.load %arg7[%c0_14, %c0_15] : memref<128x512xf32, #tpu.memory_space<vmem>>, vector<128x512xf32>
    tpu.vector_store %arg7[%c0_14, %c0_15], %30 {strides = array<i32>} : memref<128x512xf32, #tpu.memory_space<vmem>>, vector<128x512xf32>,
    return
  }
  func.func @transform_0(%arg0: i32, %arg1: i32) -> (i32, i32) {
    %c0_i32 = arith.constant 0 : i32
    %c0_i32_0 = arith.constant 0 : i32
    return %arg0, %c0_i32 : i32, i32
  }
  func.func @transform_1(%arg0: i32, %arg1: i32) -> (i32, i32) {
    %c0_i32 = arith.constant 0 : i32
    %c0_i32_0 = arith.constant 0 : i32
    %c0_i32_1 = arith.constant 0 : i32
    return %c0_i32, %c0_i32_0 : i32, i32
  }
  func.func @transform_2(%arg0: i32, %arg1: i32) -> (i32, i32) {
    %c0_i32 = arith.constant 0 : i32
    %c0_i32_0 = arith.constant 0 : i32
    %c0_i32_1 = arith.constant 0 : i32
    return %c0_i32, %c0_i32_0 : i32, i32
  }
  func.func @transform_3(%arg0: i32, %arg1: i32) -> (i32, i32) {
    %c0_i32 = arith.constant 0 : i32
    %c0_i32_0 = arith.constant 0 : i32
    return %c0_i32, %arg1 : i32, i32
  }
  func.func @transform_4(%arg0: i32, %arg1: i32) -> (i32, i32) {
    %c0_i32 = arith.constant 0 : i32
    %c0_i32_0 = arith.constant 0 : i32
    return %c0_i32, %arg1 : i32, i32
  }
  func.func @transform_5(%arg0: i32, %arg1: i32) -> (i32, i32) {
    %c0_i32 = arith.constant 0 : i32
    return %arg0, %arg1 : i32, i32
  }
}

</mosaic_0001>

<llo_original>
// kernel: tpu_custom_call.1
$region0: #{tpu_custom_call.1}
  #allocation0 [shape = 'u32[]', space=smem, size = 0x4, offset = 0x4, fixed_abs, tag = 'smem constant byte address 0x4 - core index']
  #allocation1 [shape = 'u32[144,128]{1,0:T(1,128)}', space=vmem, size = 0x12000, scoped, tag = 'internal scratch']
  %s0 = inlined_call_operand.hbm [shape: f32[128,256], index: 0, kind: input, shape index: {}]
  %s1 = inlined_call_operand.hbm [shape: f32[1,256], index: 1, kind: input, shape index: {}]
  %s2 = inlined_call_operand.vmem [shape: f32[1,256], index: 2, kind: input, shape index: {}]
  %s3 = inlined_call_operand.hbm [shape: bf16[256,512], index: 3, kind: input, shape index: {}]
  %s4 = inlined_call_operand.vmem [shape: f32[1,512], index: 4, kind: input, shape index: {}]
  %s5 = inlined_call_operand.hbm [shape: f32[128,512], index: 5, kind: output, shape index: {}]
  %s6 = sld [smem:[#allocation0]]
  $region42: #{tpu_custom_call.1} parent=0
    _
  %s8 = ssub.s32 1, %s6
  %s9 = scalar_select 0, %s8, %s6
  $region1: #{tpu_custom_call.1} parent=0
    #allocation2 [shape = 'u8[131072]{0}', space=vmem, size = 0x20000, scoped, tag = 'input window, operand 0, single buffered']
    #allocation3 [shape = 's32[1]{0}', space=sflag, size = 0x4, scoped, tag = 'scoped memory for tpu_custom_call.1']
    #allocation4 [shape = 's32[1]{0}', space=sflag, size = 0x4, scoped, tag = 'scoped memory for tpu_custom_call.1']
    #allocation5 [shape = 'u8[1024]{0}', space=vmem, size = 0x400, scoped, tag = 'input window, operand 1, single buffered']
    #allocation6 [shape = 's32[1]{0}', space=sflag, size = 0x4, scoped, tag = 'scoped memory for tpu_custom_call.1']
    #allocation7 [shape = 'u8[262144]{0}', space=vmem, size = 0x40000, scoped, tag = 'input window, operand 3, single buffered']
    #allocation8 [shape = 'u8[262144]{0}', space=vmem, size = 0x40000, scoped, tag = 'output window, operand 0, single buffered']
    %10 = vsyncpa [#allocation3], 0
    %11 = vsyncpa [#allocation6], 0
    %12 = vsyncpa [#allocation4], 0
    // Predicated region
    $region2: #{tpu_custom_call.1} parent=1 // pred_check
      _
    $region3: #{tpu_custom_call.1} parent=1 // pred_check_branch
      %14 = sbr.rel (0) target = $region5
    $region4: #{tpu_custom_call.1} parent=1 // pred_region
      %s16 = ssub.s32 4096, 4096
      %17 = vsyncadd [#allocation3], %s16
      %s18 = sshll.u32 [#allocation2], 4
      %s19 = int_to_ptr.vmem [resolvable:$true] %s18
      %24 = dma.hbm_to_vmem [thread:$0]  %s0, 4096, %s19, [#allocation3], 256, 256, 16
    $region5: #{tpu_custom_call.1} parent=1 // pred_fallthru
      _
    // Predicated region
    $region6: #{tpu_custom_call.1} parent=1 // pred_check
      _
    $region7: #{tpu_custom_call.1} parent=1 // pred_check_branch
      %26 = sbr.rel (0) target = $region9
    $region8: #{tpu_custom_call.1} parent=1 // pred_region
      %s28 = ssub.s32 32, 32
      %29 = vsyncadd [#allocation6], %s28
      %s31 = sshll.u32 [#allocation5], 4
      %s32 = int_to_ptr.vmem [resolvable:$true] %s31
      %34 = dma.hbm_to_vmem [thread:$0]  %s1, 32, %s32, [#allocation6]
    $region9: #{tpu_custom_call.1} parent=1 // pred_fallthru
      _
    // Predicated region
    $region10: #{tpu_custom_call.1} parent=1 // pred_check
      _
    $region11: #{tpu_custom_call.1} parent=1 // pred_check_branch
      %36 = sbr.rel (0) target = $region13
    $region12: #{tpu_custom_call.1} parent=1 // pred_region
      _
    $region13: #{tpu_custom_call.1} parent=1 // pred_fallthru
      _
    // Predicated region
    $region14: #{tpu_custom_call.1} parent=1 // pred_check
      _
    $region15: #{tpu_custom_call.1} parent=1 // pred_check_branch
      %38 = sbr.rel (0) target = $region17
    $region16: #{tpu_custom_call.1} parent=1 // pred_region
      %s40 = ssub.s32 8192, 8192
      %41 = vsyncadd [#allocation6], %s40
      %s42 = sshll.u32 [#allocation7], 4
      %s43 = int_to_ptr.vmem [resolvable:$true] %s42
      %48 = dma.hbm_to_vmem [thread:$0]  %s3, 8192, %s43, [#allocation6], 256, 256, 16
    $region17: #{tpu_custom_call.1} parent=1 // pred_fallthru
      _
    // Predicated region
    $region18: #{tpu_custom_call.1} parent=1 // pred_check
      _
    $region19: #{tpu_custom_call.1} parent=1 // pred_check_branch
      %50 = sbr.rel (0) target = $region21
    $region20: #{tpu_custom_call.1} parent=1 // pred_region
      _
    $region21: #{tpu_custom_call.1} parent=1 // pred_fallthru
      _
    // Predicated region
    $region22: #{tpu_custom_call.1} parent=1 // pred_check
      _
    $region23: #{tpu_custom_call.1} parent=1 // pred_check_branch
      %52 = sbr.rel (0) target = $region25
    $region24: #{tpu_custom_call.1} parent=1 // pred_region
      %53 = dma.done [#allocation3], 4096
    $region25: #{tpu_custom_call.1} parent=1 // pred_fallthru
      _
    // Predicated region
    $region26: #{tpu_custom_call.1} parent=1 // pred_check
      _
    $region27: #{tpu_custom_call.1} parent=1 // pred_check_branch
      %55 = sbr.rel (0) target = $region29
    $region28: #{tpu_custom_call.1} parent=1 // pred_region
      %56 = dma.done [#allocation6], 32
    $region29: #{tpu_custom_call.1} parent=1 // pred_fallthru
      _
    // Predicated region
    $region30: #{tpu_custom_call.1} parent=1 // pred_check
      _
    $region31: #{tpu_custom_call.1} parent=1 // pred_check_branch
      %58 = sbr.rel (0) target = $region33
    $region32: #{tpu_custom_call.1} parent=1 // pred_region
      %59 = dma.done [#allocation6], 8192
    $region33: #{tpu_custom_call.1} parent=1 // pred_fallthru
      _
    %v60 = vld [vmem:[#allocation2] sm:$0xff]
    %v61 = vld [vmem:[#allocation2 + $0x8] sm:$0xff]
    %v62 = vld [vmem:[#allocation2 + $0x10] sm:$0xff]
    %v63 = vld [vmem:[#allocation2 + $0x18] sm:$0xff]
    %v64 = vld [vmem:[#allocation2 + $0x20] sm:$0xff]
    %v65 = vld [vmem:[#allocation2 + $0x28] sm:$0xff]
    %v66 = vld [vmem:[#allocation2 + $0x30] sm:$0xff]
    %v67 = vld [vmem:[#allocation2 + $0x38] sm:$0xff]
    %v68 = vld [vmem:[#allocation2 + $0x40] sm:$0xff]
    %v69 = vld [vmem:[#allocation2 + $0x48] sm:$0xff]
    %v70 = vld [vmem:[#allocation2 + $0x50] sm:$0xff]
    %v71 = vld [vmem:[#allocation2 + $0x58] sm:$0xff]
    %v72 = vld [vmem:[#allocation2 + $0x60] sm:$0xff]
    %v73 = vld [vmem:[#allocation2 + $0x68] sm:$0xff]
    %v74 = vld [vmem:[#allocation2 + $0x70] sm:$0xff]
    %v75 = vld [vmem:[#allocation2 + $0x78] sm:$0xff]
    %v76 = vld [vmem:[#allocation2 + $0x80] sm:$0xff]
    %v77 = vld [vmem:[#allocation2 + $0x88] sm:$0xff]
    %v78 = vld [vmem:[#allocation2 + $0x90] sm:$0xff]
    %v79 = vld [vmem:[#allocation2 + $0x98] sm:$0xff]
    %v80 = vld [vmem:[#allocation2 + $0xa0] sm:$0xff]
    %v81 = vld [vmem:[#allocation2 + $0xa8] sm:$0xff]
    %v82 = vld [vmem:[#allocation2 + $0xb0] sm:$0xff]
    %v83 = vld [vmem:[#allocation2 + $0xb8] sm:$0xff]
    %v84 = vld [vmem:[#allocation2 + $0xc0] sm:$0xff]
    %v85 = vld [vmem:[#allocation2 + $0xc8] sm:$0xff]
    %v86 = vld [vmem:[#allocation2 + $0xd0] sm:$0xff]
    %v87 = vld [vmem:[#allocation2 + $0xd8] sm:$0xff]
    %v88 = vld [vmem:[#allocation2 + $0xe0] sm:$0xff]
    %v89 = vld [vmem:[#allocation2 + $0xe8] sm:$0xff]
    %v90 = vld [vmem:[#allocation2 + $0xf0] sm:$0xff]
    %v91 = vld [vmem:[#allocation2 + $0xf8] sm:$0xff]
    %v92 = vadd.f32 %v60, %v61
    %93 = vadd.xlane.f32.xlu0 %v92
    %v94 = vpop.xlane.xlu0 %93
    %v95 = vadd.f32 %v62, %v63
    %96 = vadd.xlane.f32.xlu0 %v95
    %v97 = vpop.xlane.xlu0 %96
    %v98 = vadd.f32 %v64, %v65
    %99 = vadd.xlane.f32.xlu0 %v98
    %v100 = vpop.xlane.xlu0 %99
    %v101 = vadd.f32 %v66, %v67
    %102 = vadd.xlane.f32.xlu0 %v101
    %v103 = vpop.xlane.xlu0 %102
    %v104 = vadd.f32 %v68, %v69
    %105 = vadd.xlane.f32.xlu0 %v104
    %v106 = vpop.xlane.xlu0 %105
    %v107 = vadd.f32 %v70, %v71
    %108 = vadd.xlane.f32.xlu0 %v107
    %v109 = vpop.xlane.xlu0 %108
    %v110 = vadd.f32 %v72, %v73
    %111 = vadd.xlane.f32.xlu0 %v110
    %v112 = vpop.xlane.xlu0 %111
    %v113 = vadd.f32 %v74, %v75
    %114 = vadd.xlane.f32.xlu0 %v113
    %v115 = vpop.xlane.xlu0 %114
    %v116 = vadd.f32 %v76, %v77
    %117 = vadd.xlane.f32.xlu0 %v116
    %v118 = vpop.xlane.xlu0 %117
    %v119 = vadd.f32 %v78, %v79
    %120 = vadd.xlane.f32.xlu0 %v119
    %v121 = vpop.xlane.xlu0 %120
    %v122 = vadd.f32 %v80, %v81
    %123 = vadd.xlane.f32.xlu0 %v122
    %v124 = vpop.xlane.xlu0 %123
    %v125 = vadd.f32 %v82, %v83
    %126 = vadd.xlane.f32.xlu0 %v125
    %v127 = vpop.xlane.xlu0 %126
    %v128 = vadd.f32 %v84, %v85
    %129 = vadd.xlane.f32.xlu0 %v128
    %v130 = vpop.xlane.xlu0 %129
    %v131 = vadd.f32 %v86, %v87
    %132 = vadd.xlane.f32.xlu0 %v131
    %v133 = vpop.xlane.xlu0 %132
    %v134 = vadd.f32 %v88, %v89
    %135 = vadd.xlane.f32.xlu0 %v134
    %v136 = vpop.xlane.xlu0 %135
    %v137 = vadd.f32 %v90, %v91
    %138 = vadd.xlane.f32.xlu0 %v137
    %v139 = vpop.xlane.xlu0 %138
    %v140 = vrcp.pop 256.0
    %v141 = vmul.f32 %v94, %v140
    %v142 = vmul.f32 %v97, %v140
    %v143 = vmul.f32 %v100, %v140
    %v144 = vmul.f32 %v103, %v140
    %v145 = vmul.f32 %v106, %v140
    %v146 = vmul.f32 %v109, %v140
    %v147 = vmul.f32 %v112, %v140
    %v148 = vmul.f32 %v115, %v140
    %v149 = vmul.f32 %v118, %v140
    %v150 = vmul.f32 %v121, %v140
    %v151 = vmul.f32 %v124, %v140
    %v152 = vmul.f32 %v127, %v140
    %v153 = vmul.f32 %v130, %v140
    %v154 = vmul.f32 %v133, %v140
    %v155 = vmul.f32 %v136, %v140
    %v156 = vmul.f32 %v139, %v140
    %v157 = vsub.f32 %v60, %v141
    %v158 = vsub.f32 %v61, %v141
    %v159 = vsub.f32 %v62, %v142
    %v160 = vsub.f32 %v63, %v142
    %v161 = vsub.f32 %v64, %v143
    %v162 = vsub.f32 %v65, %v143
    %v163 = vsub.f32 %v66, %v144
    %v164 = vsub.f32 %v67, %v144
    %v165 = vsub.f32 %v68, %v145
    %v166 = vsub.f32 %v69, %v145
    %v167 = vsub.f32 %v70, %v146
    %v168 = vsub.f32 %v71, %v146
    %v169 = vsub.f32 %v72, %v147
    %v170 = vsub.f32 %v73, %v147
    %v171 = vsub.f32 %v74, %v148
    %v172 = vsub.f32 %v75, %v148
    %v173 = vsub.f32 %v76, %v149
    %v174 = vsub.f32 %v77, %v149
    %v175 = vsub.f32 %v78, %v150
    %v176 = vsub.f32 %v79, %v150
    %v177 = vsub.f32 %v80, %v151
    %v178 = vsub.f32 %v81, %v151
    %v179 = vsub.f32 %v82, %v152
    %v180 = vsub.f32 %v83, %v152
    %v181 = vsub.f32 %v84, %v153
    %v182 = vsub.f32 %v85, %v153
    %v183 = vsub.f32 %v86, %v154
    %v184 = vsub.f32 %v87, %v154
    %v185 = vsub.f32 %v88, %v155
    %v186 = vsub.f32 %v89, %v155
    %v187 = vsub.f32 %v90, %v156
    %v188 = vsub.f32 %v91, %v156
    %v189 = vmul.f32 %v157, %v157
    %v190 = vmul.f32 %v158, %v158
    %v191 = vmul.f32 %v159, %v159
    %v192 = vmul.f32 %v160, %v160
    %v193 = vmul.f32 %v161, %v161
    %v194 = vmul.f32 %v162, %v162
    %v195 = vmul.f32 %v163, %v163
    %v196 = vmul.f32 %v164, %v164
    %v197 = vmul.f32 %v165, %v165
    %v198 = vmul.f32 %v166, %v166
    %v199 = vmul.f32 %v167, %v167
    %v200 = vmul.f32 %v168, %v168
    %v201 = vmul.f32 %v169, %v169
    %v202 = vmul.f32 %v170, %v170
    %v203 = vmul.f32 %v171, %v171
    %v204 = vmul.f32 %v172, %v172
    %v205 = vmul.f32 %v173, %v173
    %v206 = vmul.f32 %v174, %v174
    %v207 = vmul.f32 %v175, %v175
    %v208 = vmul.f32 %v176, %v176
    %v209 = vmul.f32 %v177, %v177
    %v210 = vmul.f32 %v178, %v178
    %v211 = vmul.f32 %v179, %v179
    %v212 = vmul.f32 %v180, %v180
    %v213 = vmul.f32 %v181, %v181
    %v214 = vmul.f32 %v182, %v182
    %v215 = vmul.f32 %v183, %v183
    %v216 = vmul.f32 %v184, %v184
    %v217 = vmul.f32 %v185, %v185
    %v218 = vmul.f32 %v186, %v186
    %v219 = vmul.f32 %v187, %v187
    %v220 = vmul.f32 %v188, %v188
    %v221 = vadd.f32 %v189, %v190
    %222 = vadd.xlane.f32.xlu0 %v221
    %v223 = vpop.xlane.xlu0 %222
    %v224 = vadd.f32 %v191, %v192
    %225 = vadd.xlane.f32.xlu0 %v224
    %v226 = vpop.xlane.xlu0 %225
    %v227 = vadd.f32 %v193, %v194
    %228 = vadd.xlane.f32.xlu0 %v227
    %v229 = vpop.xlane.xlu0 %228
    %v230 = vadd.f32 %v195, %v196
    %231 = vadd.xlane.f32.xlu0 %v230
    %v232 = vpop.xlane.xlu0 %231
    %v233 = vadd.f32 %v197, %v198
    %234 = vadd.xlane.f32.xlu0 %v233
    %v235 = vpop.xlane.xlu0 %234
    %v236 = vadd.f32 %v199, %v200
    %237 = vadd.xlane.f32.xlu0 %v236
    %v238 = vpop.xlane.xlu0 %237
    %v239 = vadd.f32 %v201, %v202
    %240 = vadd.xlane.f32.xlu0 %v239
    %v241 = vpop.xlane.xlu0 %240
    %v242 = vadd.f32 %v203, %v204
    %243 = vadd.xlane.f32.xlu0 %v242
    %v244 = vpop.xlane.xlu0 %243
    %v245 = vadd.f32 %v205, %v206
    %246 = vadd.xlane.f32.xlu0 %v245
    %v247 = vpop.xlane.xlu0 %246
    %v248 = vadd.f32 %v207, %v208
    %249 = vadd.xlane.f32.xlu0 %v248
    %v250 = vpop.xlane.xlu0 %249
    %v251 = vadd.f32 %v209, %v210
    %252 = vadd.xlane.f32.xlu0 %v251
    %v253 = vpop.xlane.xlu0 %252
    %v254 = vadd.f32 %v211, %v212
    %255 = vadd.xlane.f32.xlu0 %v254
    %v256 = vpop.xlane.xlu0 %255
    %v257 = vadd.f32 %v213, %v214
    %258 = vadd.xlane.f32.xlu0 %v257
    %v259 = vpop.xlane.xlu0 %258
    %v260 = vadd.f32 %v215, %v216
    %261 = vadd.xlane.f32.xlu0 %v260
    %v262 = vpop.xlane.xlu0 %261
    %v263 = vadd.f32 %v217, %v218
    %264 = vadd.xlane.f32.xlu0 %v263
    %v265 = vpop.xlane.xlu0 %264
    %v266 = vadd.f32 %v219, %v220
    %267 = vadd.xlane.f32.xlu0 %v266
    %v268 = vpop.xlane.xlu0 %267
    %v269 = vmul.f32 %v223, %v140
    %v270 = vmul.f32 %v226, %v140
    %v271 = vmul.f32 %v229, %v140
    %v272 = vmul.f32 %v232, %v140
    %v273 = vmul.f32 %v235, %v140
    %v274 = vmul.f32 %v238, %v140
    %v275 = vmul.f32 %v241, %v140
    %v276 = vmul.f32 %v244, %v140
    %v277 = vmul.f32 %v247, %v140
    %v278 = vmul.f32 %v250, %v140
    %v279 = vmul.f32 %v253, %v140
    %v280 = vmul.f32 %v256, %v140
    %v281 = vmul.f32 %v259, %v140
    %v282 = vmul.f32 %v262, %v140
    %v283 = vmul.f32 %v265, %v140
    %v284 = vmul.f32 %v268, %v140
    %v285 = vadd.f32 %v269, 1e-05
    %v286 = vadd.f32 %v270, 1e-05
    %v287 = vadd.f32 %v271, 1e-05
    %v288 = vadd.f32 %v272, 1e-05
    %v289 = vadd.f32 %v273, 1e-05
    %v290 = vadd.f32 %v274, 1e-05
    %v291 = vadd.f32 %v275, 1e-05
    %v292 = vadd.f32 %v276, 1e-05
    %v293 = vadd.f32 %v277, 1e-05
    %v294 = vadd.f32 %v278, 1e-05
    %v295 = vadd.f32 %v279, 1e-05
    %v296 = vadd.f32 %v280, 1e-05
    %v297 = vadd.f32 %v281, 1e-05
    %v298 = vadd.f32 %v282, 1e-05
    %v299 = vadd.f32 %v283, 1e-05
    %v300 = vadd.f32 %v284, 1e-05
    %v301 = vrsqrt.pop %v285
    %v302 = vrsqrt.pop %v286
    %v303 = vrsqrt.pop %v287
    %v304 = vrsqrt.pop %v288
    %v305 = vrsqrt.pop %v289
    %v306 = vrsqrt.pop %v290
    %v307 = vrsqrt.pop %v291
    %v308 = vrsqrt.pop %v292
    %v309 = vrsqrt.pop %v293
    %v310 = vrsqrt.pop %v294
    %v311 = vrsqrt.pop %v295
    %v312 = vrsqrt.pop %v296
    %v313 = vrsqrt.pop %v297
    %v314 = vrsqrt.pop %v298
    %v315 = vrsqrt.pop %v299
    %v316 = vrsqrt.pop %v300
    %v317 = vmul.f32 %v157, %v301
    %v318 = vmul.f32 %v158, %v301
    %v319 = vmul.f32 %v159, %v302
    %v320 = vmul.f32 %v160, %v302
    %v321 = vmul.f32 %v161, %v303
    %v322 = vmul.f32 %v162, %v303
    %v323 = vmul.f32 %v163, %v304
    %v324 = vmul.f32 %v164, %v304
    %v325 = vmul.f32 %v165, %v305
    %v326 = vmul.f32 %v166, %v305
    %v327 = vmul.f32 %v167, %v306
    %v328 = vmul.f32 %v168, %v306
    %v329 = vmul.f32 %v169, %v307
    %v330 = vmul.f32 %v170, %v307
    %v331 = vmul.f32 %v171, %v308
    %v332 = vmul.f32 %v172, %v308
    %v333 = vmul.f32 %v173, %v309
    %v334 = vmul.f32 %v174, %v309
    %v335 = vmul.f32 %v175, %v310
    %v336 = vmul.f32 %v176, %v310
    %v337 = vmul.f32 %v177, %v311
    %v338 = vmul.f32 %v178, %v311
    %v339 = vmul.f32 %v179, %v312
    %v340 = vmul.f32 %v180, %v312
    %v341 = vmul.f32 %v181, %v313
    %v342 = vmul.f32 %v182, %v313
    %v343 = vmul.f32 %v183, %v314
    %v344 = vmul.f32 %v184, %v314
    %v345 = vmul.f32 %v185, %v315
    %v346 = vmul.f32 %v186, %v315
    %v347 = vmul.f32 %v187, %v316
    %v348 = vmul.f32 %v188, %v316
    %v349 = vld [vmem:[#allocation5] sm:$0x3]
    %v351 = vlaneseq
    %v352 = vshrl.u32 %v351, 7
    %v353 = vsub.s32 0, %v352
    %v354 = vrot.slane %v349, %v353
    %v355 = vlaneseq
    %v356 = vshrl.u32 %v355, 7
    %v357 = vsub.s32 1, %v356
    %v358 = vrot.slane %v349, %v357
    %v361 = vmul.f32 %v317, %v354
    %v362 = vmul.f32 %v318, %v358
    %v363 = vmul.f32 %v319, %v354
    %v364 = vmul.f32 %v320, %v358
    %v365 = vmul.f32 %v321, %v354
    %v366 = vmul.f32 %v322, %v358
    %v367 = vmul.f32 %v323, %v354
    %v368 = vmul.f32 %v324, %v358
    %v369 = vmul.f32 %v325, %v354
    %v370 = vmul.f32 %v326, %v358
    %v371 = vmul.f32 %v327, %v354
    %v372 = vmul.f32 %v328, %v358
    %v373 = vmul.f32 %v329, %v354
    %v374 = vmul.f32 %v330, %v358
    %v375 = vmul.f32 %v331, %v354
    %v376 = vmul.f32 %v332, %v358
    %v377 = vmul.f32 %v333, %v354
    %v378 = vmul.f32 %v334, %v358
    %v379 = vmul.f32 %v335, %v354
    %v380 = vmul.f32 %v336, %v358
    %v381 = vmul.f32 %v337, %v354
    %v382 = vmul.f32 %v338, %v358
    %v383 = vmul.f32 %v339, %v354
    %v384 = vmul.f32 %v340, %v358
    %v385 = vmul.f32 %v341, %v354
    %v386 = vmul.f32 %v342, %v358
    %v387 = vmul.f32 %v343, %v354
    %v388 = vmul.f32 %v344, %v358
    %v389 = vmul.f32 %v345, %v354
    %v390 = vmul.f32 %v346, %v358
    %v391 = vmul.f32 %v347, %v354
    %v392 = vmul.f32 %v348, %v358
    %v393 = vld [vmem:[%s2] sm:$0x3]
    %v395 = vlaneseq
    %v396 = vshrl.u32 %v395, 7
    %v397 = vsub.s32 0, %v396
    %v398 = vrot.slane %v393, %v397
    %v399 = vlaneseq
    %v400 = vshrl.u32 %v399, 7
    %v401 = vsub.s32 1, %v400
    %v402 = vrot.slane %v393, %v401
    %v405 = vadd.f32 %v361, %v398
    %v406 = vadd.f32 %v362, %v402
    %v407 = vadd.f32 %v363, %v398
    %v408 = vadd.f32 %v364, %v402
    %v409 = vadd.f32 %v365, %v398
    %v410 = vadd.f32 %v366, %v402
    %v411 = vadd.f32 %v367, %v398
    %v412 = vadd.f32 %v368, %v402
    %v413 = vadd.f32 %v369, %v398
    %v414 = vadd.f32 %v370, %v402
    %v415 = vadd.f32 %v371, %v398
    %v416 = vadd.f32 %v372, %v402
    %v417 = vadd.f32 %v373, %v398
    %v418 = vadd.f32 %v374, %v402
    %v419 = vadd.f32 %v375, %v398
    %v420 = vadd.f32 %v376, %v402
    %v421 = vadd.f32 %v377, %v398
    %v422 = vadd.f32 %v378, %v402
    %v423 = vadd.f32 %v379, %v398
    %v424 = vadd.f32 %v380, %v402
    %v425 = vadd.f32 %v381, %v398
    %v426 = vadd.f32 %v382, %v402
    %v427 = vadd.f32 %v383, %v398
    %v428 = vadd.f32 %v384, %v402
    %v429 = vadd.f32 %v385, %v398
    %v430 = vadd.f32 %v386, %v402
    %v431 = vadd.f32 %v387, %v398
    %v432 = vadd.f32 %v388, %v402
    %v433 = vadd.f32 %v389, %v398
    %v434 = vadd.f32 %v390, %v402
    %v435 = vadd.f32 %v391, %v398
    %v436 = vadd.f32 %v392, %v402
    %v437 = vpack.c.bf16 %v407, %v405
    %v438 = vpack.c.bf16 %v408, %v406
    %v439 = vpack.c.bf16 %v411, %v409
    %v440 = vpack.c.bf16 %v412, %v410
    %v441 = vpack.c.bf16 %v415, %v413
    %v442 = vpack.c.bf16 %v416, %v414
    %v443 = vpack.c.bf16 %v419, %v417
    %v444 = vpack.c.bf16 %v420, %v418
    %v445 = vpack.c.bf16 %v423, %v421
    %v446 = vpack.c.bf16 %v424, %v422
    %v447 = vpack.c.bf16 %v427, %v425
    %v448 = vpack.c.bf16 %v428, %v426
    %v449 = vpack.c.bf16 %v431, %v429
    %v450 = vpack.c.bf16 %v432, %v430
    %v451 = vpack.c.bf16 %v435, %v433
    %v452 = vpack.c.bf16 %v436, %v434
    %v453 = vld [vmem:[#allocation7] sm:$0xff]
    %v454 = vld [vmem:[#allocation7 + $0x8] sm:$0xff]
    %v455 = vld [vmem:[#allocation7 + $0x10] sm:$0xff]
    %v456 = vld [vmem:[#allocation7 + $0x18] sm:$0xff]
    %v457 = vld [vmem:[#allocation7 + $0x20] sm:$0xff]
    %v458 = vld [vmem:[#allocation7 + $0x28] sm:$0xff]
    %v459 = vld [vmem:[#allocation7 + $0x30] sm:$0xff]
    %v460 = vld [vmem:[#allocation7 + $0x38] sm:$0xff]
    %v461 = vld [vmem:[#allocation7 + $0x40] sm:$0xff]
    %v462 = vld [vmem:[#allocation7 + $0x48] sm:$0xff]
    %v463 = vld [vmem:[#allocation7 + $0x50] sm:$0xff]
    %v464 = vld [vmem:[#allocation7 + $0x58] sm:$0xff]
    %v465 = vld [vmem:[#allocation7 + $0x60] sm:$0xff]
    %v466 = vld [vmem:[#allocation7 + $0x68] sm:$0xff]
    %v467 = vld [vmem:[#allocation7 + $0x70] sm:$0xff]
    %v468 = vld [vmem:[#allocation7 + $0x78] sm:$0xff]
    %v469 = vld [vmem:[#allocation7 + $0x80] sm:$0xff]
    %v470 = vld [vmem:[#allocation7 + $0x88] sm:$0xff]
    %v471 = vld [vmem:[#allocation7 + $0x90] sm:$0xff]
    %v472 = vld [vmem:[#allocation7 + $0x98] sm:$0xff]
    %v473 = vld [vmem:[#allocation7 + $0xa0] sm:$0xff]
    %v474 = vld [vmem:[#allocation7 + $0xa8] sm:$0xff]
    %v475 = vld [vmem:[#allocation7 + $0xb0] sm:$0xff]
    %v476 = vld [vmem:[#allocation7 + $0xb8] sm:$0xff]
    %v477 = vld [vmem:[#allocation7 + $0xc0] sm:$0xff]
    %v478 = vld [vmem:[#allocation7 + $0xc8] sm:$0xff]
    %v479 = vld [vmem:[#allocation7 + $0xd0] sm:$0xff]
    %v480 = vld [vmem:[#allocation7 + $0xd8] sm:$0xff]
    %v481 = vld [vmem:[#allocation7 + $0xe0] sm:$0xff]
    %v482 = vld [vmem:[#allocation7 + $0xe8] sm:$0xff]
    %v483 = vld [vmem:[#allocation7 + $0xf0] sm:$0xff]
    %v484 = vld [vmem:[#allocation7 + $0xf8] sm:$0xff]
    %v485 = vld [vmem:[#allocation7 + $0x100] sm:$0xff]
    %v486 = vld [vmem:[#allocation7 + $0x108] sm:$0xff]
    %v487 = vld [vmem:[#allocation7 + $0x110] sm:$0xff]
    %v488 = vld [vmem:[#allocation7 + $0x118] sm:$0xff]
    %v489 = vld [vmem:[#allocation7 + $0x120] sm:$0xff]
    %v490 = vld [vmem:[#allocation7 + $0x128] sm:$0xff]
    %v491 = vld [vmem:[#allocation7 + $0x130] sm:$0xff]
    %v492 = vld [vmem:[#allocation7 + $0x138] sm:$0xff]
    %v493 = vld [vmem:[#allocation7 + $0x140] sm:$0xff]
    %v494 = vld [vmem:[#allocation7 + $0x148] sm:$0xff]
    %v495 = vld [vmem:[#allocation7 + $0x150] sm:$0xff]
    %v496 = vld [vmem:[#allocation7 + $0x158] sm:$0xff]
    %v497 = vld [vmem:[#allocation7 + $0x160] sm:$0xff]
    %v498 = vld [vmem:[#allocation7 + $0x168] sm:$0xff]
    %v499 = vld [vmem:[#allocation7 + $0x170] sm:$0xff]
    %v500 = vld [vmem:[#allocation7 + $0x178] sm:$0xff]
    %v501 = vld [vmem:[#allocation7 + $0x180] sm:$0xff]
    %v502 = vld [vmem:[#allocation7 + $0x188] sm:$0xff]
    %v503 = vld [vmem:[#allocation7 + $0x190] sm:$0xff]
    %v504 = vld [vmem:[#allocation7 + $0x198] sm:$0xff]
    %v505 = vld [vmem:[#allocation7 + $0x1a0] sm:$0xff]
    %v506 = vld [vmem:[#allocation7 + $0x1a8] sm:$0xff]
    %v507 = vld [vmem:[#allocation7 + $0x1b0] sm:$0xff]
    %v508 = vld [vmem:[#allocation7 + $0x1b8] sm:$0xff]
    %v509 = vld [vmem:[#allocation7 + $0x1c0] sm:$0xff]
    %v510 = vld [vmem:[#allocation7 + $0x1c8] sm:$0xff]
    %v511 = vld [vmem:[#allocation7 + $0x1d0] sm:$0xff]
    %v512 = vld [vmem:[#allocation7 + $0x1d8] sm:$0xff]
    %v513 = vld [vmem:[#allocation7 + $0x1e0] sm:$0xff]
    %v514 = vld [vmem:[#allocation7 + $0x1e8] sm:$0xff]
    %v515 = vld [vmem:[#allocation7 + $0x1f0] sm:$0xff]
    %v516 = vld [vmem:[#allocation7 + $0x1f8] sm:$0xff]
    %v517 = vld [vmem:[%s4] sm:$0xf]
    %v519 = vlaneseq
    %v520 = vshrl.u32 %v519, 7
    %v521 = vsub.s32 0, %v520
    %v522 = vrot.slane %v517, %v521
    %v523 = vlaneseq
    %v524 = vshrl.u32 %v523, 7
    %v525 = vsub.s32 1, %v524
    %v526 = vrot.slane %v517, %v525
    %v527 = vlaneseq
    %v528 = vshrl.u32 %v527, 7
    %v529 = vsub.s32 2, %v528
    %v530 = vrot.slane %v517, %v529
    %v531 = vlaneseq
    %v532 = vshrl.u32 %v531, 7
    %v533 = vsub.s32 3, %v532
    %v534 = vrot.slane %v517, %v533
    %v603 = vunpack.c.l.b16 %v453
    %v604 = vunpack.c.h.b16 %v453
    %v605 = vunpack.c.l.b16 %v454
    %v606 = vunpack.c.h.b16 %v454
    %v607 = vunpack.c.l.b16 %v455
    %v608 = vunpack.c.h.b16 %v455
    %v609 = vunpack.c.l.b16 %v456
    %v610 = vunpack.c.h.b16 %v456
    %v611 = vunpack.c.l.b16 %v457
    %v612 = vunpack.c.h.b16 %v457
    %v613 = vunpack.c.l.b16 %v458
    %v614 = vunpack.c.h.b16 %v458
    %v615 = vunpack.c.l.b16 %v459
    %v616 = vunpack.c.h.b16 %v459
    %v617 = vunpack.c.l.b16 %v460
    %v618 = vunpack.c.h.b16 %v460
    %v619 = vunpack.c.l.b16 %v461
    %v620 = vunpack.c.h.b16 %v461
    %v621 = vunpack.c.l.b16 %v462
    %v622 = vunpack.c.h.b16 %v462
    %v623 = vunpack.c.l.b16 %v463
    %v624 = vunpack.c.h.b16 %v463
    %v625 = vunpack.c.l.b16 %v464
    %v626 = vunpack.c.h.b16 %v464
    %v627 = vunpack.c.l.b16 %v465
    %v628 = vunpack.c.h.b16 %v465
    %v629 = vunpack.c.l.b16 %v466
    %v630 = vunpack.c.h.b16 %v466
    %v631 = vunpack.c.l.b16 %v467
    %v632 = vunpack.c.h.b16 %v467
    %v633 = vunpack.c.l.b16 %v468
    %v634 = vunpack.c.h.b16 %v468
    %v635 = vunpack.c.l.b16 %v469
    %v636 = vunpack.c.h.b16 %v469
    %v637 = vunpack.c.l.b16 %v470
    %v638 = vunpack.c.h.b16 %v470
    %v639 = vunpack.c.l.b16 %v471
    %v640 = vunpack.c.h.b16 %v471
    %v641 = vunpack.c.l.b16 %v472
    %v642 = vunpack.c.h.b16 %v472
    %v643 = vunpack.c.l.b16 %v473
    %v644 = vunpack.c.h.b16 %v473
    %v645 = vunpack.c.l.b16 %v474
    %v646 = vunpack.c.h.b16 %v474
    %v647 = vunpack.c.l.b16 %v475
    %v648 = vunpack.c.h.b16 %v475
    %v649 = vunpack.c.l.b16 %v476
    %v650 = vunpack.c.h.b16 %v476
    %v651 = vunpack.c.l.b16 %v477
    %v652 = vunpack.c.h.b16 %v477
    %v653 = vunpack.c.l.b16 %v478
    %v654 = vunpack.c.h.b16 %v478
    %v655 = vunpack.c.l.b16 %v479
    %v656 = vunpack.c.h.b16 %v479
    %v657 = vunpack.c.l.b16 %v480
    %v658 = vunpack.c.h.b16 %v480
    %v659 = vunpack.c.l.b16 %v481
    %v660 = vunpack.c.h.b16 %v481
    %v661 = vunpack.c.l.b16 %v482
    %v662 = vunpack.c.h.b16 %v482
    %v663 = vunpack.c.l.b16 %v483
    %v664 = vunpack.c.h.b16 %v483
    %v665 = vunpack.c.l.b16 %v484
    %v666 = vunpack.c.h.b16 %v484
    %v667 = vunpack.c.l.b16 %v485
    %v668 = vunpack.c.h.b16 %v485
    %v669 = vunpack.c.l.b16 %v486
    %v670 = vunpack.c.h.b16 %v486
    %v671 = vunpack.c.l.b16 %v487
    %v672 = vunpack.c.h.b16 %v487
    %v673 = vunpack.c.l.b16 %v488
    %v674 = vunpack.c.h.b16 %v488
    %v675 = vunpack.c.l.b16 %v489
    %v676 = vunpack.c.h.b16 %v489
    %v677 = vunpack.c.l.b16 %v490
    %v678 = vunpack.c.h.b16 %v490
    %v679 = vunpack.c.l.b16 %v491
    %v680 = vunpack.c.h.b16 %v491
    %v681 = vunpack.c.l.b16 %v492
    %v682 = vunpack.c.h.b16 %v492
    %v683 = vunpack.c.l.b16 %v493
    %v684 = vunpack.c.h.b16 %v493
    %v685 = vunpack.c.l.b16 %v494
    %v686 = vunpack.c.h.b16 %v494
    %v687 = vunpack.c.l.b16 %v495
    %v688 = vunpack.c.h.b16 %v495
    %v689 = vunpack.c.l.b16 %v496
    %v690 = vunpack.c.h.b16 %v496
    %v691 = vunpack.c.l.b16 %v497
    %v692 = vunpack.c.h.b16 %v497
    %v693 = vunpack.c.l.b16 %v498
    %v694 = vunpack.c.h.b16 %v498
    %v695 = vunpack.c.l.b16 %v499
    %v696 = vunpack.c.h.b16 %v499
    %v697 = vunpack.c.l.b16 %v500
    %v698 = vunpack.c.h.b16 %v500
    %v699 = vunpack.c.l.b16 %v501
    %v700 = vunpack.c.h.b16 %v501
    %v701 = vunpack.c.l.b16 %v502
    %v702 = vunpack.c.h.b16 %v502
    %v703 = vunpack.c.l.b16 %v503
    %v704 = vunpack.c.h.b16 %v503
    %v705 = vunpack.c.l.b16 %v504
    %v706 = vunpack.c.h.b16 %v504
    %v707 = vunpack.c.l.b16 %v505
    %v708 = vunpack.c.h.b16 %v505
    %v709 = vunpack.c.l.b16 %v506
    %v710 = vunpack.c.h.b16 %v506
    %v711 = vunpack.c.l.b16 %v507
    %v712 = vunpack.c.h.b16 %v507
    %v713 = vunpack.c.l.b16 %v508
    %v714 = vunpack.c.h.b16 %v508
    %v715 = vunpack.c.l.b16 %v509
    %v716 = vunpack.c.h.b16 %v509
    %v717 = vunpack.c.l.b16 %v510
    %v718 = vunpack.c.h.b16 %v510
    %v719 = vunpack.c.l.b16 %v511
    %v720 = vunpack.c.h.b16 %v511
    %v721 = vunpack.c.l.b16 %v512
    %v722 = vunpack.c.h.b16 %v512
    %v723 = vunpack.c.l.b16 %v513
    %v724 = vunpack.c.h.b16 %v513
    %v725 = vunpack.c.l.b16 %v514
    %v726 = vunpack.c.h.b16 %v514
    %v727 = vunpack.c.l.b16 %v515
    %v728 = vunpack.c.h.b16 %v515
    %v729 = vunpack.c.l.b16 %v516
    %v730 = vunpack.c.h.b16 %v516
    %v731 = vpack.c.b16 %v607, %v603
    %v732 = vpack.c.b16 %v608, %v604
    %v733 = vpack.c.b16 %v609, %v605
    %v734 = vpack.c.b16 %v610, %v606
    %v735 = vpack.c.b16 %v615, %v611
    %v736 = vpack.c.b16 %v616, %v612
    %v737 = vpack.c.b16 %v617, %v613
    %v738 = vpack.c.b16 %v618, %v614
    %v739 = vpack.c.b16 %v623, %v619
    %v740 = vpack.c.b16 %v624, %v620
    %v741 = vpack.c.b16 %v625, %v621
    %v742 = vpack.c.b16 %v626, %v622
    %v743 = vpack.c.b16 %v631, %v627
    %v744 = vpack.c.b16 %v632, %v628
    %v745 = vpack.c.b16 %v633, %v629
    %v746 = vpack.c.b16 %v634, %v630
    %v747 = vpack.c.b16 %v639, %v635
    %v748 = vpack.c.b16 %v640, %v636
    %v749 = vpack.c.b16 %v641, %v637
    %v750 = vpack.c.b16 %v642, %v638
    %v751 = vpack.c.b16 %v647, %v643
    %v752 = vpack.c.b16 %v648, %v644
    %v753 = vpack.c.b16 %v649, %v645
    %v754 = vpack.c.b16 %v650, %v646
    %v755 = vpack.c.b16 %v655, %v651
    %v756 = vpack.c.b16 %v656, %v652
    %v757 = vpack.c.b16 %v657, %v653
    %v758 = vpack.c.b16 %v658, %v654
    %v759 = vpack.c.b16 %v663, %v659
    %v760 = vpack.c.b16 %v664, %v660
    %v761 = vpack.c.b16 %v665, %v661
    %v762 = vpack.c.b16 %v666, %v662
    %v763 = vpack.c.b16 %v671, %v667
    %v764 = vpack.c.b16 %v672, %v668
    %v765 = vpack.c.b16 %v673, %v669
    %v766 = vpack.c.b16 %v674, %v670
    %v767 = vpack.c.b16 %v679, %v675
    %v768 = vpack.c.b16 %v680, %v676
    %v769 = vpack.c.b16 %v681, %v677
    %v770 = vpack.c.b16 %v682, %v678
    %v771 = vpack.c.b16 %v687, %v683
    %v772 = vpack.c.b16 %v688, %v684
    %v773 = vpack.c.b16 %v689, %v685
    %v774 = vpack.c.b16 %v690, %v686
    %v775 = vpack.c.b16 %v695, %v691
    %v776 = vpack.c.b16 %v696, %v692
    %v777 = vpack.c.b16 %v697, %v693
    %v778 = vpack.c.b16 %v698, %v694
    %v779 = vpack.c.b16 %v703, %v699
    %v780 = vpack.c.b16 %v704, %v700
    %v781 = vpack.c.b16 %v705, %v701
    %v782 = vpack.c.b16 %v706, %v702
    %v783 = vpack.c.b16 %v711, %v707
    %v784 = vpack.c.b16 %v712, %v708
    %v785 = vpack.c.b16 %v713, %v709
    %v786 = vpack.c.b16 %v714, %v710
    %v787 = vpack.c.b16 %v719, %v715
    %v788 = vpack.c.b16 %v720, %v716
    %v789 = vpack.c.b16 %v721, %v717
    %v790 = vpack.c.b16 %v722, %v718
    %v791 = vpack.c.b16 %v727, %v723
    %v792 = vpack.c.b16 %v728, %v724
    %v793 = vpack.c.b16 %v729, %v725
    %v794 = vpack.c.b16 %v730, %v726
    %859 = vmatprep.subr.bf16.mxu0 %v760
    %860 = vmatpush1.bf16.msra.mxu0 %v759
    %861 = vmatprep.subr.bf16.mxu0 %v756
    %862 = vmatpush1.bf16.msra.mxu0 %v755
    %863 = vmatprep.subr.bf16.mxu0 %v752
    %864 = vmatpush1.bf16.msra.mxu0 %v751
    %865 = vmatprep.subr.bf16.mxu0 %v748
    %866 = vmatpush1.bf16.msra.mxu0 %v747
    %867 = vmatprep.subr.bf16.mxu0 %v744
    %868 = vmatpush1.bf16.msra.mxu0 %v743
    %869 = vmatprep.subr.bf16.mxu0 %v740
    %870 = vmatpush1.bf16.msra.mxu0 %v739
    %871 = vmatprep.subr.bf16.mxu0 %v736
    %872 = vmatpush1.bf16.msra.mxu0 %v735
    %873 = vmatprep.subr.bf16.mxu0 %v732
    %874 = vmatpush1.bf16.msra.mxu0 %v731
    %875 = vmatprep.subr.bf16.mxu0 %v792
    %876 = vmatpush2.bf16.msra.mxu0 %v791
    %877 = vmatprep.subr.bf16.mxu0 %v788
    %878 = vmatpush2.bf16.msra.mxu0 %v787
    %879 = vmatprep.subr.bf16.mxu0 %v784
    %880 = vmatpush2.bf16.msra.mxu0 %v783
    %881 = vmatprep.subr.bf16.mxu0 %v780
    %882 = vmatpush2.bf16.msra.mxu0 %v779
    %883 = vmatprep.subr.bf16.mxu0 %v776
    %884 = vmatpush2.bf16.msra.mxu0 %v775
    %885 = vmatprep.subr.bf16.mxu0 %v772
    %886 = vmatpush2.bf16.msra.mxu0 %v771
    %887 = vmatprep.subr.bf16.mxu0 %v768
    %888 = vmatpush2.bf16.msra.mxu0 %v767
    %889 = vmatprep.subr.bf16.mxu0 %v764
    %890 = vmatpush2.bf16.msra.mxu0 %v763
    %891 = vmatprep.mubr.bf16.mxu0 %v438
    %892 = vmatmul.mubr.bf16.gmra.mxu0 %v437
    %v893 = vpop.f32.mrf.mxu0
    %v894 = vadd.f32 %v522, %v893
    %v895 = vpop.f32.mrf.mxu0
    %v896 = vadd.f32 %v526, %v895
    %v897 = vpop.f32.mrf.mxu0
    %v898 = vadd.f32 %v522, %v897
    %v899 = vpop.f32.mrf.mxu0
    %v900 = vadd.f32 %v526, %v899
    %901 = vmatprep.mubr.bf16.mxu0 %v440
    %902 = vmatmul.mubr.bf16.gmra.mxu0 %v439
    %v903 = vpop.f32.mrf.mxu0
    %v904 = vadd.f32 %v522, %v903
    %v905 = vpop.f32.mrf.mxu0
    %v906 = vadd.f32 %v526, %v905
    %v907 = vpop.f32.mrf.mxu0
    %v908 = vadd.f32 %v522, %v907
    %v909 = vpop.f32.mrf.mxu0
    %v910 = vadd.f32 %v526, %v909
    %911 = vmatprep.mubr.bf16.mxu0 %v442
    %912 = vmatmul.mubr.bf16.gmra.mxu0 %v441
    %v913 = vpop.f32.mrf.mxu0
    %v914 = vadd.f32 %v522, %v913
    %v915 = vpop.f32.mrf.mxu0
    %v916 = vadd.f32 %v526, %v915
    %v917 = vpop.f32.mrf.mxu0
    %v918 = vadd.f32 %v522, %v917
    %v919 = vpop.f32.mrf.mxu0
    %v920 = vadd.f32 %v526, %v919
    %921 = vmatprep.mubr.bf16.mxu0 %v444
    %922 = vmatmul.mubr.bf16.gmra.mxu0 %v443
    %v923 = vpop.f32.mrf.mxu0
    %v924 = vadd.f32 %v522, %v923
    %v925 = vpop.f32.mrf.mxu0
    %v926 = vadd.f32 %v526, %v925
    %v927 = vpop.f32.mrf.mxu0
    %v928 = vadd.f32 %v522, %v927
    %v929 = vpop.f32.mrf.mxu0
    %v930 = vadd.f32 %v526, %v929
    %931 = vmatprep.mubr.bf16.mxu0 %v446
    %932 = vmatmul.mubr.bf16.gmra.mxu0 %v445
    %v933 = vpop.f32.mrf.mxu0
    %v934 = vadd.f32 %v522, %v933
    %v935 = vpop.f32.mrf.mxu0
    %v936 = vadd.f32 %v526, %v935
    %v937 = vpop.f32.mrf.mxu0
    %v938 = vadd.f32 %v522, %v937
    %v939 = vpop.f32.mrf.mxu0
    %v940 = vadd.f32 %v526, %v939
    %941 = vmatprep.mubr.bf16.mxu0 %v448
    %942 = vmatmul.mubr.bf16.gmra.mxu0 %v447
    %v943 = vpop.f32.mrf.mxu0
    %v944 = vadd.f32 %v522, %v943
    %v945 = vpop.f32.mrf.mxu0
    %v946 = vadd.f32 %v526, %v945
    %v947 = vpop.f32.mrf.mxu0
    %v948 = vadd.f32 %v522, %v947
    %v949 = vpop.f32.mrf.mxu0
    %v950 = vadd.f32 %v526, %v949
    %951 = vmatprep.mubr.bf16.mxu0 %v450
    %952 = vmatmul.mubr.bf16.gmra.mxu0 %v449
    %v953 = vpop.f32.mrf.mxu0
    %v954 = vadd.f32 %v522, %v953
    %v955 = vpop.f32.mrf.mxu0
    %v956 = vadd.f32 %v526, %v955
    %v957 = vpop.f32.mrf.mxu0
    %v958 = vadd.f32 %v522, %v957
    %v959 = vpop.f32.mrf.mxu0
    %v960 = vadd.f32 %v526, %v959
    %961 = vmatprep.mubr.bf16.mxu0 %v452
    %962 = vmatmul.mubr.bf16.gmra.mxu0 %v451
    %v963 = vpop.f32.mrf.mxu0
    %v964 = vadd.f32 %v522, %v963
    %v965 = vpop.f32.mrf.mxu0
    %v966 = vadd.f32 %v526, %v965
    %v967 = vpop.f32.mrf.mxu0
    %v968 = vadd.f32 %v522, %v967
    %v969 = vpop.f32.mrf.mxu0
    %v970 = vadd.f32 %v526, %v969
    %971 = vdwg.mxu0
    %972 = vmatprep.subr.bf16.mxu0 %v762
    %973 = vmatpush1.bf16.msra.mxu0 %v761
    %974 = vmatprep.subr.bf16.mxu0 %v758
    %975 = vmatpush1.bf16.msra.mxu0 %v757
    %976 = vmatprep.subr.bf16.mxu0 %v754
    %977 = vmatpush1.bf16.msra.mxu0 %v753
    %978 = vmatprep.subr.bf16.mxu0 %v750
    %979 = vmatpush1.bf16.msra.mxu0 %v749
    %980 = vmatprep.subr.bf16.mxu0 %v746
    %981 = vmatpush1.bf16.msra.mxu0 %v745
    %982 = vmatprep.subr.bf16.mxu0 %v742
    %983 = vmatpush1.bf16.msra.mxu0 %v741
    %984 = vmatprep.subr.bf16.mxu0 %v738
    %985 = vmatpush1.bf16.msra.mxu0 %v737
    %986 = vmatprep.subr.bf16.mxu0 %v734
    %987 = vmatpush1.bf16.msra.mxu0 %v733
    %988 = vmatprep.subr.bf16.mxu0 %v794
    %989 = vmatpush2.bf16.msra.mxu0 %v793
    %990 = vmatprep.subr.bf16.mxu0 %v790
    %991 = vmatpush2.bf16.msra.mxu0 %v789
    %992 = vmatprep.subr.bf16.mxu0 %v786
    %993 = vmatpush2.bf16.msra.mxu0 %v785
    %994 = vmatprep.subr.bf16.mxu0 %v782
    %995 = vmatpush2.bf16.msra.mxu0 %v781
    %996 = vmatprep.subr.bf16.mxu0 %v778
    %997 = vmatpush2.bf16.msra.mxu0 %v777
    %998 = vmatprep.subr.bf16.mxu0 %v774
    %999 = vmatpush2.bf16.msra.mxu0 %v773
    %1000 = vmatprep.subr.bf16.mxu0 %v770
    %1001 = vmatpush2.bf16.msra.mxu0 %v769
    %1002 = vmatprep.subr.bf16.mxu0 %v766
    %1003 = vmatpush2.bf16.msra.mxu0 %v765
    %1004 = vmatprep.mubr.bf16.mxu0 %v438
    %1005 = vmatmul.mubr.bf16.gmra.mxu0 %v437
    %v1006 = vpop.f32.mrf.mxu0
    %v1007 = vadd.f32 %v530, %v1006
    %v1008 = vpop.f32.mrf.mxu0
    %v1009 = vadd.f32 %v534, %v1008
    %v1010 = vpop.f32.mrf.mxu0
    %v1011 = vadd.f32 %v530, %v1010
    %v1012 = vpop.f32.mrf.mxu0
    %v1013 = vadd.f32 %v534, %v1012
    %1014 = vmatprep.mubr.bf16.mxu0 %v440
    %1015 = vmatmul.mubr.bf16.gmra.mxu0 %v439
    %v1016 = vpop.f32.mrf.mxu0
    %v1017 = vadd.f32 %v530, %v1016
    %v1018 = vpop.f32.mrf.mxu0
    %v1019 = vadd.f32 %v534, %v1018
    %v1020 = vpop.f32.mrf.mxu0
    %v1021 = vadd.f32 %v530, %v1020
    %v1022 = vpop.f32.mrf.mxu0
    %v1023 = vadd.f32 %v534, %v1022
    %1024 = vmatprep.mubr.bf16.mxu0 %v442
    %1025 = vmatmul.mubr.bf16.gmra.mxu0 %v441
    %v1026 = vpop.f32.mrf.mxu0
    %v1027 = vadd.f32 %v530, %v1026
    %v1028 = vpop.f32.mrf.mxu0
    %v1029 = vadd.f32 %v534, %v1028
    %v1030 = vpop.f32.mrf.mxu0
    %v1031 = vadd.f32 %v530, %v1030
    %v1032 = vpop.f32.mrf.mxu0
    %v1033 = vadd.f32 %v534, %v1032
    %1034 = vmatprep.mubr.bf16.mxu0 %v444
    %1035 = vmatmul.mubr.bf16.gmra.mxu0 %v443
    %v1036 = vpop.f32.mrf.mxu0
    %v1037 = vadd.f32 %v530, %v1036
    %v1038 = vpop.f32.mrf.mxu0
    %v1039 = vadd.f32 %v534, %v1038
    %v1040 = vpop.f32.mrf.mxu0
    %v1041 = vadd.f32 %v530, %v1040
    %v1042 = vpop.f32.mrf.mxu0
    %v1043 = vadd.f32 %v534, %v1042
    %1044 = vmatprep.mubr.bf16.mxu0 %v446
    %1045 = vmatmul.mubr.bf16.gmra.mxu0 %v445
    %v1046 = vpop.f32.mrf.mxu0
    %v1047 = vadd.f32 %v530, %v1046
    %v1048 = vpop.f32.mrf.mxu0
    %v1049 = vadd.f32 %v534, %v1048
    %v1050 = vpop.f32.mrf.mxu0
    %v1051 = vadd.f32 %v530, %v1050
    %v1052 = vpop.f32.mrf.mxu0
    %v1053 = vadd.f32 %v534, %v1052
    %1054 = vmatprep.mubr.bf16.mxu0 %v448
    %1055 = vmatmul.mubr.bf16.gmra.mxu0 %v447
    %v1056 = vpop.f32.mrf.mxu0
    %v1057 = vadd.f32 %v530, %v1056
    %v1058 = vpop.f32.mrf.mxu0
    %v1059 = vadd.f32 %v534, %v1058
    %v1060 = vpop.f32.mrf.mxu0
    %v1061 = vadd.f32 %v530, %v1060
    %v1062 = vpop.f32.mrf.mxu0
    %v1063 = vadd.f32 %v534, %v1062
    %1064 = vmatprep.mubr.bf16.mxu0 %v450
    %1065 = vmatmul.mubr.bf16.gmra.mxu0 %v449
    %v1066 = vpop.f32.mrf.mxu0
    %v1067 = vadd.f32 %v530, %v1066
    %v1068 = vpop.f32.mrf.mxu0
    %v1069 = vadd.f32 %v534, %v1068
    %v1070 = vpop.f32.mrf.mxu0
    %v1071 = vadd.f32 %v530, %v1070
    %v1072 = vpop.f32.mrf.mxu0
    %v1073 = vadd.f32 %v534, %v1072
    %1074 = vmatprep.mubr.bf16.mxu0 %v452
    %1075 = vmatmul.mubr.bf16.gmra.mxu0 %v451
    %v1076 = vpop.f32.mrf.mxu0
    %v1077 = vadd.f32 %v530, %v1076
    %v1078 = vpop.f32.mrf.mxu0
    %v1079 = vadd.f32 %v534, %v1078
    %v1080 = vpop.f32.mrf.mxu0
    %v1081 = vadd.f32 %v530, %v1080
    %v1082 = vpop.f32.mrf.mxu0
    %v1083 = vadd.f32 %v534, %v1082
    %1084 = vdwg.mxu0
    %1085 = vst [vmem:[#allocation8] sm:$0xff] %v894
    %1086 = vst [vmem:[#allocation8 + $0x8] sm:$0xff] %v896
    %1087 = vst [vmem:[#allocation8 + $0x10] sm:$0xff] %v1007
    %1088 = vst [vmem:[#allocation8 + $0x18] sm:$0xff] %v1009
    %1089 = vst [vmem:[#allocation8 + $0x20] sm:$0xff] %v898
    %1090 = vst [vmem:[#allocation8 + $0x28] sm:$0xff] %v900
    %1091 = vst [vmem:[#allocation8 + $0x30] sm:$0xff] %v1011
    %1092 = vst [vmem:[#allocation8 + $0x38] sm:$0xff] %v1013
    %1093 = vst [vmem:[#allocation8 + $0x40] sm:$0xff] %v904
    %1094 = vst [vmem:[#allocation8 + $0x48] sm:$0xff] %v906
    %1095 = vst [vmem:[#allocation8 + $0x50] sm:$0xff] %v1017
    %1096 = vst [vmem:[#allocation8 + $0x58] sm:$0xff] %v1019
    %1097 = vst [vmem:[#allocation8 + $0x60] sm:$0xff] %v908
    %1098 = vst [vmem:[#allocation8 + $0x68] sm:$0xff] %v910
    %1099 = vst [vmem:[#allocation8 + $0x70] sm:$0xff] %v1021
    %1100 = vst [vmem:[#allocation8 + $0x78] sm:$0xff] %v1023
    %1101 = vst [vmem:[#allocation8 + $0x80] sm:$0xff] %v914
    %1102 = vst [vmem:[#allocation8 + $0x88] sm:$0xff] %v916
    %1103 = vst [vmem:[#allocation8 + $0x90] sm:$0xff] %v1027
    %1104 = vst [vmem:[#allocation8 + $0x98] sm:$0xff] %v1029
    %1105 = vst [vmem:[#allocation8 + $0xa0] sm:$0xff] %v918
    %1106 = vst [vmem:[#allocation8 + $0xa8] sm:$0xff] %v920
    %1107 = vst [vmem:[#allocation8 + $0xb0] sm:$0xff] %v1031
    %1108 = vst [vmem:[#allocation8 + $0xb8] sm:$0xff] %v1033
    %1109 = vst [vmem:[#allocation8 + $0xc0] sm:$0xff] %v924
    %1110 = vst [vmem:[#allocation8 + $0xc8] sm:$0xff] %v926
    %1111 = vst [vmem:[#allocation8 + $0xd0] sm:$0xff] %v1037
    %1112 = vst [vmem:[#allocation8 + $0xd8] sm:$0xff] %v1039
    %1113 = vst [vmem:[#allocation8 + $0xe0] sm:$0xff] %v928
    %1114 = vst [vmem:[#allocation8 + $0xe8] sm:$0xff] %v930
    %1115 = vst [vmem:[#allocation8 + $0xf0] sm:$0xff] %v1041
    %1116 = vst [vmem:[#allocation8 + $0xf8] sm:$0xff] %v1043
    %1117 = vst [vmem:[#allocation8 + $0x100] sm:$0xff] %v934
    %1118 = vst [vmem:[#allocation8 + $0x108] sm:$0xff] %v936
    %1119 = vst [vmem:[#allocation8 + $0x110] sm:$0xff] %v1047
    %1120 = vst [vmem:[#allocation8 + $0x118] sm:$0xff] %v1049
    %1121 = vst [vmem:[#allocation8 + $0x120] sm:$0xff] %v938
    %1122 = vst [vmem:[#allocation8 + $0x128] sm:$0xff] %v940
    %1123 = vst [vmem:[#allocation8 + $0x130] sm:$0xff] %v1051
    %1124 = vst [vmem:[#allocation8 + $0x138] sm:$0xff] %v1053
    %1125 = vst [vmem:[#allocation8 + $0x140] sm:$0xff] %v944
    %1126 = vst [vmem:[#allocation8 + $0x148] sm:$0xff] %v946
    %1127 = vst [vmem:[#allocation8 + $0x150] sm:$0xff] %v1057
    %1128 = vst [vmem:[#allocation8 + $0x158] sm:$0xff] %v1059
    %1129 = vst [vmem:[#allocation8 + $0x160] sm:$0xff] %v948
    %1130 = vst [vmem:[#allocation8 + $0x168] sm:$0xff] %v950
    %1131 = vst [vmem:[#allocation8 + $0x170] sm:$0xff] %v1061
    %1132 = vst [vmem:[#allocation8 + $0x178] sm:$0xff] %v1063
    %1133 = vst [vmem:[#allocation8 + $0x180] sm:$0xff] %v954
    %1134 = vst [vmem:[#allocation8 + $0x188] sm:$0xff] %v956
    %1135 = vst [vmem:[#allocation8 + $0x190] sm:$0xff] %v1067
    %1136 = vst [vmem:[#allocation8 + $0x198] sm:$0xff] %v1069
    %1137 = vst [vmem:[#allocation8 + $0x1a0] sm:$0xff] %v958
    %1138 = vst [vmem:[#allocation8 + $0x1a8] sm:$0xff] %v960
    %1139 = vst [vmem:[#allocation8 + $0x1b0] sm:$0xff] %v1071
    %1140 = vst [vmem:[#allocation8 + $0x1b8] sm:$0xff] %v1073
    %1141 = vst [vmem:[#allocation8 + $0x1c0] sm:$0xff] %v964
    %1142 = vst [vmem:[#allocation8 + $0x1c8] sm:$0xff] %v966
    %1143 = vst [vmem:[#allocation8 + $0x1d0] sm:$0xff] %v1077
    %1144 = vst [vmem:[#allocation8 + $0x1d8] sm:$0xff] %v1079
    %1145 = vst [vmem:[#allocation8 + $0x1e0] sm:$0xff] %v968
    %1146 = vst [vmem:[#allocation8 + $0x1e8] sm:$0xff] %v970
    %1147 = vst [vmem:[#allocation8 + $0x1f0] sm:$0xff] %v1081
    %1148 = vst [vmem:[#allocation8 + $0x1f8] sm:$0xff] %v1083
    // Predicated region
    $region34: #{tpu_custom_call.1} parent=1 // pred_check
      _
    $region35: #{tpu_custom_call.1} parent=1 // pred_check_branch
      %1150 = sbr.rel (0) target = $region37
    $region36: #{tpu_custom_call.1} parent=1 // pred_region
      %s1152 = ssub.s32 8192, 8192
      %1153 = vsyncadd [#allocation4], %s1152
      %s1154 = sshll.u32 [#allocation8], 4
      %s1155 = int_to_ptr.vmem [resolvable:$true] %s1154
      %1160 = dma.vmem_to_hbm [thread:$0]  %s1155, 8192, %s5, [#allocation4], 512, 512, 32
    $region37: #{tpu_custom_call.1} parent=1 // pred_fallthru
      _
    // Predicated region
    $region38: #{tpu_custom_call.1} parent=1 // pred_check
      _
    $region39: #{tpu_custom_call.1} parent=1 // pred_check_branch
      %1162 = sbr.rel (0) target = $region41
    $region40: #{tpu_custom_call.1} parent=1 // pred_region
      %1163 = dma.done [#allocation4], 8192
    $region41: #{tpu_custom_call.1} parent=1 // pred_fallthru
      _
    %1164 = vsyncpa [#allocation3], 1
    %1165 = vsyncpa [#allocation6], 1
    %1166 = vsyncpa [#allocation4], 1

</llo_original>
